<compile_context>
chip_gen: v5e
topology: v5e:2x2
jax: 0.10.0
libtpu: 0.0.40
codegen_flags: <defaults>
</compile_context>

<pallas_src>
import math

import jax
import jax.numpy as jnp
from jax import lax
from jax.experimental import pallas as pl
from jax.experimental.pallas import tpu as pltpu


_LANES = 512                 # lane-dense minor dim (multiple of 128)
_GROUP_ROWS = 8              # sublanes per group
# elements per (8, _LANES) group = 4096


def _cdiv(a, b):
    return -(-a // b)


def _device_kind():
    try:
        return jax.devices()[0].device_kind.lower()
    except Exception:
        return ""


def _is_v7(kind):
    return ("v7" in kind) or ("tpu7" in kind)


def _default_num_parallel(kind):
    # 2 TensorCores per chip: v7x and v4/v5p megacore.  v5e/v6e have 1 TC.
    if _is_v7(kind) or "v4" in kind or "v5p" in kind:
        return 2
    return 1


def _default_block_bytes(kind):
    # v7x: 64 MiB VMEM per TC -> 2 inputs x 2 buffers x 8 MiB = 32 MiB.
    # v5e/v6e: 128 MiB VMEM -> bigger blocks shave per-step pipeline overhead.
    return (8 << 20) if _is_v7(kind) else (16 << 20)


def _vmem_cap_bytes(kind):
    return (48 << 20) if _is_v7(kind) else (100 << 20)


def _make_kernel(G, tile_k, sub, steps, needs_mask, lanes):
    """Kernel summing sqrt(p1*p2) of a (tile_k, 8, lanes) block into o_ref."""
    num_slabs = tile_k // sub

    def kernel(p1_ref, p2_ref, o_ref):
        p = pl.program_id(0)
        n = pl.program_id(1)

        @pl.when(n == 0)
        def _():
            o_ref[...] = jnp.zeros_like(o_ref)

        # First global group-row covered by this block (true, un-clamped index;
        # blocks past the data are fully masked and contribute exactly zero).
        row0 = (p * steps + n) * tile_k

        def slab(i, acc):
            start = pl.multiple_of(i * sub, sub)
            a = p1_ref[pl.ds(start, sub)].astype(jnp.float32)
            b = p2_ref[pl.ds(start, sub)].astype(jnp.float32)
            s = jnp.sqrt(a * b)
            if needs_mask:
                rows = row0 + start + lax.broadcasted_iota(
                    jnp.int32, (sub, _GROUP_ROWS, lanes), 0)
                s = jnp.where(rows < G, s, 0.0)
            # Fold the slab's leading axis: pure VPU adds into a 4-vreg acc.
            return acc + jnp.sum(s, axis=0)

        acc = lax.fori_loop(0, num_slabs, slab,
                            jnp.zeros((_GROUP_ROWS, lanes), jnp.float32))
        o_ref[...] += acc

    return kernel


def _bhatt_total_sum(p1, p2, *, lanes, target_block_bytes, num_parallel,
                     vmem_cap):
    """sum(sqrt(p1 * p2)) over all elements, as a float32 scalar."""
    total = math.prod(p1.shape)
    group = _GROUP_ROWS * lanes
    itemsize = max(jnp.dtype(p1.dtype).itemsize, jnp.dtype(p2.dtype).itemsize)

    f1 = p1.reshape(-1)
    f2 = p2.reshape(-1)
    rem = total % group
    if rem:
        # TODO(synk): this pad copies both inputs once; it is only hit when
        # numel is not a multiple of 4096 (pad <= 4095 zeros; sqrt(0*0) == 0).
        # Group-aligned inputs are streamed zero-copy.
        pad = group - rem
        f1 = jnp.pad(f1, (0, pad))
        f2 = jnp.pad(f2, (0, pad))
    G = _cdiv(total, group)
    x1 = f1.reshape(G, _GROUP_ROWS, lanes)
    x2 = f2.reshape(G, _GROUP_ROWS, lanes)

    # Per-input block rows, bounded by requested bytes and the VMEM cap
    # (2 inputs x double buffering + margin must stay under the cap).
    max_block_bytes = min(int(target_block_bytes), (vmem_cap - (8 << 20)) // 4)
    tile_k = max(1, min(max_block_bytes // (group * itemsize), G))
    sub = min(8, tile_k)
    tile_k = (tile_k // sub) * sub              # multiple of the slab size

    num_blocks = _cdiv(G, tile_k)
    p_par = max(1, min(int(num_parallel), num_blocks))
    steps = _cdiv(num_blocks, p_par)
    # Any grid-level raggedness (partial last block / unused trailing blocks)
    # is handled by in-kernel row masking instead of padding the inputs.
    needs_mask = (p_par * steps * tile_k) != G

    block_bytes = tile_k * group * itemsize
    vmem_limit = int(min(max(32 << 20, 4 * block_bytes + (8 << 20)), vmem_cap))

    def in_idx(p, n):
        # Clamp so blocks past the data re-fetch the last valid block;
        # the kernel masks them to zero.
        return (jnp.minimum(p * steps + n, num_blocks - 1), 0, 0)

    kernel = _make_kernel(G, tile_k, sub, steps, needs_mask, lanes)

    partials = pl.pallas_call(
        kernel,
        out_shape=jax.ShapeDtypeStruct((p_par * _GROUP_ROWS, lanes),
                                       jnp.float32),
        grid=(p_par, steps),
        in_specs=[
            pl.BlockSpec((tile_k, _GROUP_ROWS, lanes), in_idx),
            pl.BlockSpec((tile_k, _GROUP_ROWS, lanes), in_idx),
        ],
        out_specs=pl.BlockSpec((_GROUP_ROWS, lanes), lambda p, n: (p, 0)),
        compiler_params=pltpu.CompilerParams(
            dimension_semantics=("parallel", "arbitrary"),
            vmem_limit_bytes=vmem_limit,
        ),
    )(x1, x2)
    # Tiny (p_par*8, lanes) array: finish the cross-lane reduce in plain JAX.
    return jnp.sum(partials)


def bhattacharyya(p1, p2, rgb=False, *, lanes=_LANES, target_block_bytes=None,
                  num_parallel=None, min_kernel_elements=1 << 18):
    """Pallas equivalent of Bhattacharyya()(p1, p2, rgb=...). Returns a scalar."""
    assert p1.shape == p2.shape, "p1 and p2 must have the same shape"
    total = math.prod(p1.shape)

    if total == 0:
        total_sum = jnp.float32(0.0)
    elif total < min_kernel_elements:
        # Small histogram fast path: XLA fusion beats kernel launch overhead.
        total_sum = jnp.sum(
            jnp.sqrt(p1.astype(jnp.float32) * p2.astype(jnp.float32)))
    else:
        kind = _device_kind()
        if num_parallel is None:
            num_parallel = _default_num_parallel(kind)
        if target_block_bytes is None:
            target_block_bytes = _default_block_bytes(kind)
        total_sum = _bhatt_total_sum(
            p1, p2, lanes=lanes, target_block_bytes=target_block_bytes,
            num_parallel=num_parallel, vmem_cap=_vmem_cap_bytes(kind))

    if rgb:
        assert p1.ndim >= 3, "rgb=True sums over dims 1 and 2"
        # numel remaining after torch's two sum(dim=1) calls -> mean divisor.
        divisor = total // (p1.shape[1] * p1.shape[2])
        return total_sum / divisor
    return total_sum


def bhattacharyya_ref(p1, p2, rgb=False):
    """Pure-JAX reference mirroring the PyTorch forward."""
    s = jnp.sqrt(p1.astype(jnp.float32) * p2.astype(jnp.float32))
    if rgb:
        return jnp.mean(jnp.sum(jnp.sum(s, axis=1), axis=1))
    return jnp.sum(s)


if __name__ == "__main__":
    key = jax.random.PRNGKey(0)
    keys = jax.random.split(key, 8)

    # Small histogram-like inputs (B, C, N_bins), normalized along bins.
    p1 = jax.random.uniform(keys[0], (2, 3, 256), dtype=jnp.float32)
    p2 = jax.random.uniform(keys[1], (2, 3, 256), dtype=jnp.float32)
    p1 = p1 / jnp.sum(p1, axis=-1, keepdims=True)
    p2 = p2 / jnp.sum(p2, axis=-1, keepdims=True)

    # Group-aligned case (49152 elems = 12 groups): zero-copy, multi-block
    # accumulation with a small forced block size.
    q1 = jax.random.uniform(keys[2], (2, 3, 8192), dtype=jnp.float32)
    q2 = jax.random.uniform(keys[3], (2, 3, 8192), dtype=jnp.float32)

    # Non-aligned case (10500 elems): tiny group pad + in-kernel row masking;
    # num_parallel=2 also exercises the clamped, fully-masked trailing block.
    r1 = jax.random.uniform(keys[4], (3, 5, 700), dtype=jnp.float32)
    r2 = jax.random.uniform(keys[5], (3, 5, 700), dtype=jnp.float32)

    # Moderately sized input taking the kernel path with default tuning.
    s1 = jax.random.uniform(keys[6], (2, 3, 65536), dtype=jnp.float32)
    s2 = jax.random.uniform(keys[7], (2, 3, 65536), dtype=jnp.float32)

    checks = [
        (bhattacharyya(p1, p2, rgb=False, min_kernel_elements=0),
         bhattacharyya_ref(p1, p2, rgb=False)),
        (bhattacharyya(p1, p2, rgb=True, min_kernel_elements=0),
         bhattacharyya_ref(p1, p2, rgb=True)),
        (bhattacharyya(q1, q2, rgb=False, target_block_bytes=1 << 15,
                       min_kernel_elements=0),
         bhattacharyya_ref(q1, q2, rgb=False)),
        (bhattacharyya(q1, q2, rgb=True, target_block_bytes=1 << 15,
                       min_kernel_elements=0),
         bhattacharyya_ref(q1, q2, rgb=True)),
        (bhattacharyya(r1, r2, rgb=False, target_block_bytes=1 << 14,
                       num_parallel=2, min_kernel_elements=0),
         bhattacharyya_ref(r1, r2, rgb=False)),
        (bhattacharyya(r1, r2, rgb=True, target_block_bytes=1 << 15,
                       min_kernel_elements=0),
         bhattacharyya_ref(r1, r2, rgb=True)),
        (bhattacharyya(q1.astype(jnp.bfloat16), q2.astype(jnp.bfloat16),
                       rgb=False, target_block_bytes=1 << 15,
                       min_kernel_elements=0),
         bhattacharyya_ref(q1.astype(jnp.bfloat16), q2.astype(jnp.bfloat16),
                           rgb=False)),
        (bhattacharyya(s1, s2, rgb=False),
         bhattacharyya_ref(s1, s2, rgb=False)),
    ]
    for out, ref in checks:
        out = jax.block_until_ready(out)
        ref = jax.block_until_ready(ref)
        assert jnp.allclose(out, ref, rtol=1e-5, atol=1e-5), (out, ref)
    print("KERNEL_OK")
</pallas_src>

<mosaic_0001>
module attributes {stable_mosaic.version = 11 : i64} {
  func.func @kernel(%arg0: i32, %arg1: i32, %arg2: memref<1x8x512xf32, #tpu.memory_space<vmem>>, %arg3: memref<1x8x512xf32, #tpu.memory_space<vmem>>, %arg4: memref<8x512xf32, #tpu.memory_space<vmem>>) attributes {dimension_semantics = [#tpu.dimension_semantics<parallel>, #tpu.dimension_semantics<arbitrary>], iteration_bounds = array<i64: 1, 1>, scalar_prefetch = 0 : i64, scratch_operands = 0 : i64, tpu.core_type = #tpu.core_type<tc>, window_params = [{transform_indices = @transform_0, window_bounds = array<i64: 1, 8, 512>}, {transform_indices = @transform_1, window_bounds = array<i64: 1, 8, 512>}, {transform_indices = @transform_2, window_bounds = array<i64: 8, 512>}]} {
    %c0_i32 = arith.constant 0 : i32
    %0 = arith.cmpi eq, %arg1, %c0_i32 : i32
    %1 = arith.extui %0 : i1 to i32
    %c0_i32_0 = arith.constant 0 : i32
    %2 = arith.cmpi ne, %1, %c0_i32_0 : i32
    scf.if %2 {
      %cst_11 = arith.constant 0.000000e+00 : f32
      %17 = vector.broadcast %cst_11 : f32 to vector<8x512xf32>
      %c0_12 = arith.constant 0 : index
      %c0_13 = arith.constant 0 : index
      %18 = vector.load %arg4[%c0_12, %c0_13] : memref<8x512xf32, #tpu.memory_space<vmem>>, vector<8x512xf32>
      tpu.vector_store %arg4[%c0_12, %c0_13], %17 {strides = array<i32>} : memref<8x512xf32, #tpu.memory_space<vmem>>, vector<8x512xf32>,
    } else {
    }
    %cst = arith.constant 0.000000e+00 : f32
    %3 = vector.broadcast %cst : f32 to vector<8x512xf32>
    %c0_i32_1 = arith.constant 0 : i32
    %c1_i32 = arith.constant 1 : i32
    %4 = arith.muli %c0_i32_1, %c1_i32 : i32
    %5 = tpu.assume_multiple %4, 1 : i32
    %6 = arith.index_cast %5 : i32 to index
    %c0 = arith.constant 0 : index
    %c0_2 = arith.constant 0 : index
    %7 = vector.load %arg2[%6, %c0, %c0_2] : memref<1x8x512xf32, #tpu.memory_space<vmem>>, vector<1x8x512xf32>
    %8 = arith.index_cast %5 : i32 to index
    %c0_3 = arith.constant 0 : index
    %c0_4 = arith.constant 0 : index
    %9 = vector.load %arg3[%8, %c0_3, %c0_4] : memref<1x8x512xf32, #tpu.memory_space<vmem>>, vector<1x8x512xf32>
    %10 = arith.mulf %7, %9 : vector<1x8x512xf32>
    %11 = math.sqrt %10 : vector<1x8x512xf32>
    %cst_5 = arith.constant dense<0.000000e+00> : vector<8x512xf32>
    %12 = vector.multi_reduction <add>, %11, %cst_5 [0] : vector<1x8x512xf32> to vector<8x512xf32>
    %13 = arith.addf %3, %12 : vector<8x512xf32>
    %c1_i32_6 = arith.constant 1 : i32
    %c0_7 = arith.constant 0 : index
    %c0_8 = arith.constant 0 : index
    %14 = vector.load %arg4[%c0_7, %c0_8] : memref<8x512xf32, #tpu.memory_space<vmem>>, vector<8x512xf32>
    %15 = arith.addf %14, %13 : vector<8x512xf32>
    %c0_9 = arith.constant 0 : index
    %c0_10 = arith.constant 0 : index
    %16 = vector.load %arg4[%c0_9, %c0_10] : memref<8x512xf32, #tpu.memory_space<vmem>>, vector<8x512xf32>
    tpu.vector_store %arg4[%c0_9, %c0_10], %15 {strides = array<i32>} : memref<8x512xf32, #tpu.memory_space<vmem>>, vector<8x512xf32>,
    return
  }
  func.func @transform_0(%arg0: i32, %arg1: i32) -> (i32, i32, i32) {
    %c1_i32 = arith.constant 1 : i32
    %0 = arith.muli %arg0, %c1_i32 : i32
    %1 = arith.addi %0, %arg1 : i32
    %c0_i32 = arith.constant 0 : i32
    %2 = arith.minsi %1, %c0_i32 : i32
    %c0_i32_0 = arith.constant 0 : i32
    %c0_i32_1 = arith.constant 0 : i32
    %c0_i32_2 = arith.constant 0 : i32
    return %2, %c0_i32_0, %c0_i32_1 : i32, i32, i32
  }
  func.func @transform_1(%arg0: i32, %arg1: i32) -> (i32, i32, i32) {
    %c1_i32 = arith.constant 1 : i32
    %0 = arith.muli %arg0, %c1_i32 : i32
    %1 = arith.addi %0, %arg1 : i32
    %c0_i32 = arith.constant 0 : i32
    %2 = arith.minsi %1, %c0_i32 : i32
    %c0_i32_0 = arith.constant 0 : i32
    %c0_i32_1 = arith.constant 0 : i32
    %c0_i32_2 = arith.constant 0 : i32
    return %2, %c0_i32_0, %c0_i32_1 : i32, i32, i32
  }
  func.func @transform_2(%arg0: i32, %arg1: i32) -> (i32, i32) {
    %c0_i32 = arith.constant 0 : i32
    %c0_i32_0 = arith.constant 0 : i32
    return %arg0, %c0_i32 : i32, i32
  }
}

</mosaic_0001>

<llo_original>
// kernel: tpu_custom_call.1
$region0: #{tpu_custom_call.1}
  #allocation0 [shape = 'u32[]', space=smem, size = 0x4, offset = 0x4, fixed_abs, tag = 'smem constant byte address 0x4 - core index']
  #allocation1 [shape = 'u32[72,128]{1,0:T(1,128)}', space=vmem, size = 0x9000, scoped, tag = 'internal scratch']
  %s0 = inlined_call_operand.hbm [shape: f32[1,8,512], index: 0, kind: input, shape index: {}]
  %s1 = inlined_call_operand.hbm [shape: f32[1,8,512], index: 1, kind: input, shape index: {}]
  %s2 = inlined_call_operand.hbm [shape: f32[8,512], index: 2, kind: output, shape index: {}]
  %s3 = sld [smem:[#allocation0]]
  $region30: #{tpu_custom_call.1} parent=0
    _
  %s5 = ssub.s32 1, %s3
  %s6 = scalar_select 0, %s5, %s3
  $region1: #{tpu_custom_call.1} parent=0
    #allocation2 [shape = 'u8[16384]{0}', space=vmem, size = 0x4000, scoped, tag = 'input window, operand 0, single buffered']
    #allocation3 [shape = 's32[1]{0}', space=sflag, size = 0x4, scoped, tag = 'scoped memory for tpu_custom_call.1']
    #allocation4 [shape = 's32[1]{0}', space=sflag, size = 0x4, scoped, tag = 'scoped memory for tpu_custom_call.1']
    #allocation5 [shape = 'u8[16384]{0}', space=vmem, size = 0x4000, scoped, tag = 'input window, operand 1, single buffered']
    #allocation6 [shape = 's32[1]{0}', space=sflag, size = 0x4, scoped, tag = 'scoped memory for tpu_custom_call.1']
    #allocation7 [shape = 'u8[16384]{0}', space=vmem, size = 0x4000, scoped, tag = 'output window, operand 0, single buffered']
    %7 = vsyncpa [#allocation3], 0
    %8 = vsyncpa [#allocation6], 0
    %9 = vsyncpa [#allocation4], 0
    // Predicated region
    $region2: #{tpu_custom_call.1} parent=1 // pred_check
      _
    $region3: #{tpu_custom_call.1} parent=1 // pred_check_branch
      %11 = sbr.rel (0) target = $region5
    $region4: #{tpu_custom_call.1} parent=1 // pred_region
      %s12 = sadd.s32 0, 0
      %p13 = scmp.lt.s32.totalorder %s12, 0
      %s14 = scalar_select %p13, %s12, 0
      %16 = vsyncadd [#allocation3], 0
      %s17 = smul.addr %s14, 4
      %s18 = smul.addr %s17, 8
      %s19 = scalar_lea.hbm %s0, %s18
      %s21 = sshll.u32 %s19, 4
      %s22 = int_to_ptr.hbm [resolvable:$true] %s21
      %s23 = sshll.u32 [#allocation2], 4
      %s24 = int_to_ptr.vmem [resolvable:$true] %s23
      %26 = dma.hbm_to_vmem [thread:$0]  %s22, 512, %s24, [#allocation3]
    $region5: #{tpu_custom_call.1} parent=1 // pred_fallthru
      _
    // Predicated region
    $region6: #{tpu_custom_call.1} parent=1 // pred_check
      _
    $region7: #{tpu_custom_call.1} parent=1 // pred_check_branch
      %28 = sbr.rel (0) target = $region9
    $region8: #{tpu_custom_call.1} parent=1 // pred_region
      %s29 = sadd.s32 0, 0
      %p30 = scmp.lt.s32.totalorder %s29, 0
      %s31 = scalar_select %p30, %s29, 0
      %33 = vsyncadd [#allocation6], 0
      %s34 = smul.addr %s31, 4
      %s35 = smul.addr %s34, 8
      %s36 = scalar_lea.hbm %s1, %s35
      %s38 = sshll.u32 %s36, 4
      %s39 = int_to_ptr.hbm [resolvable:$true] %s38
      %s40 = sshll.u32 [#allocation5], 4
      %s41 = int_to_ptr.vmem [resolvable:$true] %s40
      %43 = dma.hbm_to_vmem [thread:$0]  %s39, 512, %s41, [#allocation6]
    $region9: #{tpu_custom_call.1} parent=1 // pred_fallthru
      _
    // Predicated region
    $region10: #{tpu_custom_call.1} parent=1 // pred_check
      _
    $region11: #{tpu_custom_call.1} parent=1 // pred_check_branch
      %45 = sbr.rel (0) target = $region13
    $region12: #{tpu_custom_call.1} parent=1 // pred_region
      %47 = dma.done [#allocation3], 512
    $region13: #{tpu_custom_call.1} parent=1 // pred_fallthru
      _
    // Predicated region
    $region14: #{tpu_custom_call.1} parent=1 // pred_check
      _
    $region15: #{tpu_custom_call.1} parent=1 // pred_check_branch
      %49 = sbr.rel (0) target = $region17
    $region16: #{tpu_custom_call.1} parent=1 // pred_region
      %51 = dma.done [#allocation6], 512
    $region17: #{tpu_custom_call.1} parent=1 // pred_fallthru
      _
    %s52 = sadd.s32 0, 0
    %p53 = scmp.lt.s32.totalorder %s52, 0
    %s54 = scalar_select %p53, %s52, 0
    %s55 = sadd.s32 0, 0
    %p56 = scmp.lt.s32.totalorder %s55, 0
    %s57 = scalar_select %p56, %s55, 0
    %p58 = scmp.eq.s32.totalorder 0, 0
    // Predicated region
    $region18: #{tpu_custom_call.1} parent=1 // pred_check
      %p59 = pneg %p58
    $region19: #{tpu_custom_call.1} parent=1 // pred_check_branch
      %61 = sbr.rel (%p59) target = $region21
    $region20: #{tpu_custom_call.1} parent=1 // pred_region
      %62 = vst [vmem:[#allocation7] sm:$0xff] 0.0
      %63 = vst [vmem:[#allocation7 + $0x8] sm:$0xff] 0.0
      %64 = vst [vmem:[#allocation7 + $0x10] sm:$0xff] 0.0
      %65 = vst [vmem:[#allocation7 + $0x18] sm:$0xff] 0.0
    $region21: #{tpu_custom_call.1} parent=1 // pred_fallthru
      _
    %s66 = smul.u32 0, 4
    %s67 = smul.addr %s66, 8
    %s68 = scalar_lea.vmem [#allocation2], %s67
    %v69 = vld [vmem:[%s68] sm:$0xff]
    %v70 = vld [vmem:[%s68 + $0x8] sm:$0xff]
    %v71 = vld [vmem:[%s68 + $0x10] sm:$0xff]
    %v72 = vld [vmem:[%s68 + $0x18] sm:$0xff]
    %s73 = smul.addr %s66, 8
    %s74 = scalar_lea.vmem [#allocation5], %s73
    %v75 = vld [vmem:[%s74] sm:$0xff]
    %v76 = vld [vmem:[%s74 + $0x8] sm:$0xff]
    %v77 = vld [vmem:[%s74 + $0x10] sm:$0xff]
    %v78 = vld [vmem:[%s74 + $0x18] sm:$0xff]
    %v79 = vmul.f32 %v69, %v75
    %v80 = vmul.f32 %v70, %v76
    %v81 = vmul.f32 %v71, %v77
    %v82 = vmul.f32 %v72, %v78
    %v83 = vrsqrt.pop %v79
    %v84 = vmul.f32 %v83, %v79
    %v85 = vmul.f32 %v84, %v83
    %v86 = vmul.f32 0.5, %v85
    %v87 = vsub.f32 1.5, %v86
    %v88 = vmul.f32 %v83, %v87
    %v89 = vmul.f32 %v79, %v88
    %vm90 = vcmp.eq.f32.partialorder %v79, inf
    %v91 = vsel %vm90, %v79, %v89
    %vm92 = vcmp.eq.f32.partialorder %v79, 0.0
    %v93 = vand.u32 %v79, 2147483648
    %v94 = vsel %vm92, %v93, %v91
    %v95 = vrsqrt.pop %v80
    %v96 = vmul.f32 %v95, %v80
    %v97 = vmul.f32 %v96, %v95
    %v98 = vmul.f32 0.5, %v97
    %v99 = vsub.f32 1.5, %v98
    %v100 = vmul.f32 %v95, %v99
    %v101 = vmul.f32 %v80, %v100
    %vm102 = vcmp.eq.f32.partialorder %v80, inf
    %v103 = vsel %vm102, %v80, %v101
    %vm104 = vcmp.eq.f32.partialorder %v80, 0.0
    %v105 = vand.u32 %v80, 2147483648
    %v106 = vsel %vm104, %v105, %v103
    %v107 = vrsqrt.pop %v81
    %v108 = vmul.f32 %v107, %v81
    %v109 = vmul.f32 %v108, %v107
    %v110 = vmul.f32 0.5, %v109
    %v111 = vsub.f32 1.5, %v110
    %v112 = vmul.f32 %v107, %v111
    %v113 = vmul.f32 %v81, %v112
    %vm114 = vcmp.eq.f32.partialorder %v81, inf
    %v115 = vsel %vm114, %v81, %v113
    %vm116 = vcmp.eq.f32.partialorder %v81, 0.0
    %v117 = vand.u32 %v81, 2147483648
    %v118 = vsel %vm116, %v117, %v115
    %v119 = vrsqrt.pop %v82
    %v120 = vmul.f32 %v119, %v82
    %v121 = vmul.f32 %v120, %v119
    %v122 = vmul.f32 0.5, %v121
    %v123 = vsub.f32 1.5, %v122
    %v124 = vmul.f32 %v119, %v123
    %v125 = vmul.f32 %v82, %v124
    %vm126 = vcmp.eq.f32.partialorder %v82, inf
    %v127 = vsel %vm126, %v82, %v125
    %vm128 = vcmp.eq.f32.partialorder %v82, 0.0
    %v129 = vand.u32 %v82, 2147483648
    %v130 = vsel %vm128, %v129, %v127
    %v131 = vadd.f32 %v94, 0.0
    %v132 = vadd.f32 %v106, 0.0
    %v133 = vadd.f32 %v118, 0.0
    %v134 = vadd.f32 %v130, 0.0
    %v135 = vadd.f32 %v131, 0.0
    %v136 = vadd.f32 %v132, 0.0
    %v137 = vadd.f32 %v133, 0.0
    %v138 = vadd.f32 %v134, 0.0
    %v139 = vld [vmem:[#allocation7] sm:$0xff]
    %v140 = vld [vmem:[#allocation7 + $0x8] sm:$0xff]
    %v141 = vld [vmem:[#allocation7 + $0x10] sm:$0xff]
    %v142 = vld [vmem:[#allocation7 + $0x18] sm:$0xff]
    %v143 = vadd.f32 %v139, %v135
    %v144 = vadd.f32 %v140, %v136
    %v145 = vadd.f32 %v141, %v137
    %v146 = vadd.f32 %v142, %v138
    %147 = vst [vmem:[#allocation7] sm:$0xff] %v143
    %148 = vst [vmem:[#allocation7 + $0x8] sm:$0xff] %v144
    %149 = vst [vmem:[#allocation7 + $0x10] sm:$0xff] %v145
    %150 = vst [vmem:[#allocation7 + $0x18] sm:$0xff] %v146
    // Predicated region
    $region22: #{tpu_custom_call.1} parent=1 // pred_check
      _
    $region23: #{tpu_custom_call.1} parent=1 // pred_check_branch
      %152 = sbr.rel (0) target = $region25
    $region24: #{tpu_custom_call.1} parent=1 // pred_region
      %154 = vsyncadd [#allocation4], 0
      %s156 = sshll.u32 [#allocation7], 4
      %s157 = int_to_ptr.vmem [resolvable:$true] %s156
      %s158 = sshll.u32 %s2, 4
      %s159 = int_to_ptr.hbm [resolvable:$true] %s158
      %161 = dma.vmem_to_hbm [thread:$0]  %s157, 512, %s159, [#allocation4]
    $region25: #{tpu_custom_call.1} parent=1 // pred_fallthru
      _
    // Predicated region
    $region26: #{tpu_custom_call.1} parent=1 // pred_check
      _
    $region27: #{tpu_custom_call.1} parent=1 // pred_check_branch
      %163 = sbr.rel (0) target = $region29
    $region28: #{tpu_custom_call.1} parent=1 // pred_region
      %165 = dma.done [#allocation4], 512
    $region29: #{tpu_custom_call.1} parent=1 // pred_fallthru
      _
    %166 = vsyncpa [#allocation3], 1
    %167 = vsyncpa [#allocation6], 1
    %168 = vsyncpa [#allocation4], 1

</llo_original>
